<compile_context>
chip_gen: v7x
topology: tpu7x:2x2x1
jax: 0.10.0
libtpu: 0.0.40
codegen_flags: <defaults>
</compile_context>

<pallas_src>
import functools

import jax
import jax.numpy as jnp
from jax import lax
from jax.experimental import pallas as pl
from jax.experimental.pallas import tpu as pltpu


def _round_up(x, m):
    return (x + m - 1) // m * m


def _temporal_block_kernel(xprev_ref, xcur_ref, w1_ref, b1_ref, w2_ref, b2_ref,
                           wd_ref, bd_ref, out_ref,
                           xs_ref, h_ref, p1_ref, p2_ref,
                           *, K, dilation, TL, pad):
    """Computes one (batch element, L-tile) output block.

    Block shapes:
      xprev_ref : (C_in, TL)        previous L tile of x (halo source; unused at l==0)
      xcur_ref  : (C_in, TL)        current L tile of x
      w1_ref    : (C_out, K*C_in)   dcc1 weight, taps folded into contraction dim
      b1_ref    : (C_out, 1)        f32
      w2_ref    : (C_out, K*C_out)  dcc2 weight, taps folded
      b2_ref    : (C_out, 1)        f32
      wd_ref    : (C_out, C_in)     1x1 downsample weight
      bd_ref    : (C_out, 1)        f32
      out_ref   : (C_out, TL)       f32
    Scratch:
      xs_ref    : (C_in, 2*TL)      [prev tile | cur tile] staging buffer
      h_ref     : (C_out, TL+pad)   hidden activation incl. left halo of `pad` cols
      p1_ref    : (K*C_in, TL+pad)  im2col operand for dcc1
      p2_ref    : (K*C_out, TL)     im2col operand for dcc2
    """
    l = pl.program_id(1)
    N1 = TL + pad
    c_in = xcur_ref.shape[0]
    c_out = out_ref.shape[0]

    # ---- stage [prev | cur] x tiles; prev half is zero at the causal boundary.
    @pl.when(l == 0)
    def _():
        xs_ref[:, :TL] = jnp.zeros((c_in, TL), xs_ref.dtype)

    @pl.when(l > 0)
    def _():
        xs_ref[:, :TL] = xprev_ref[...]

    xs_ref[:, TL:] = xcur_ref[...]

    # ---- dcc1: fold the K taps into one wide-contraction matmul (im2col) ----
    # h1 column j corresponds to time  c0 - pad + j  (includes dcc2's halo).
    for k in range(K):
        s = TL - 2 * pad + k * dilation
        p1_ref[k * c_in:(k + 1) * c_in, :] = xs_ref[:, s:s + N1]
    a1 = jnp.dot(w1_ref[...], p1_ref[...], preferred_element_type=jnp.float32)
    h1 = jnp.maximum(a1 + b1_ref[...], 0.0)           # bias + ReLU in f32 (VPU)
    if pad > 0:
        # Halo columns that fall before t == 0 must be zero (causal pad), not relu(b1).
        col = lax.broadcasted_iota(jnp.int32, (c_out, N1), 1)
        h1 = jnp.where(jnp.logical_or(col >= pad, l > 0), h1, 0.0)
    h_ref[...] = h1.astype(h_ref.dtype)
    # dropout1 -> identity (eval mode)

    # ---- dcc2: same folded-tap matmul, operand gathered from h scratch -------
    for k in range(K):
        s = k * dilation
        p2_ref[k * c_out:(k + 1) * c_out, :] = h_ref[:, s:s + TL]
    a2 = jnp.dot(w2_ref[...], p2_ref[...], preferred_element_type=jnp.float32)
    h2 = jnp.maximum(a2 + b2_ref[...], 0.0)
    # dropout2 -> identity (eval mode)

    # ---- residual branch: 1x1 conv on the (aligned) current x tile -----------
    res = jnp.dot(wd_ref[...], xcur_ref[...],
                  preferred_element_type=jnp.float32) + bd_ref[...]

    out_ref[...] = jnp.maximum(h2 + res, 0.0).astype(out_ref.dtype)


def temporal_block_forward(x, w1, b1, w2, b2, wd, bd, *, dilation,
                           compute_dtype=jnp.bfloat16, l_tile=512):
    """x: (B, C_in, L) f32. Weights in PyTorch Conv1d layout (C_out, C_in, K)."""
    B, C_in, L = x.shape
    C_out, _, K = w1.shape
    pad = dilation * (K - 1)

    # L tile: multiple of 128 (lane-dense stores), >= 2*pad (so the causal halo
    # fits in one previous tile), capped at l_tile for VMEM headroom (v7x-safe).
    TL = min(l_tile, _round_up(L, 128))
    TL = max(TL, _round_up(2 * pad, 128))
    Lp = _round_up(L, TL)
    n_l = Lp // TL
    N1 = TL + pad

    x_p = x if Lp == L else jnp.pad(x, ((0, 0), (0, 0), (0, Lp - L)))
    x_p = x_p.astype(compute_dtype)

    # Fold the K taps into the contraction dim: W1f[o, k*C_in + i] = w1[o, i, k].
    w1f = jnp.transpose(w1, (0, 2, 1)).reshape(C_out, K * C_in).astype(compute_dtype)
    w2f = jnp.transpose(w2, (0, 2, 1)).reshape(C_out, K * C_out).astype(compute_dtype)
    wdf = wd[:, :, 0].astype(compute_dtype)
    b1c = b1.reshape(C_out, 1).astype(jnp.float32)
    b2c = b2.reshape(C_out, 1).astype(jnp.float32)
    bdc = bd.reshape(C_out, 1).astype(jnp.float32)

    kernel = functools.partial(_temporal_block_kernel,
                               K=K, dilation=dilation, TL=TL, pad=pad)

    def _wspec(shape):
        return pl.BlockSpec(shape, lambda b, l: (0,) * len(shape))

    out = pl.pallas_call(
        kernel,
        out_shape=jax.ShapeDtypeStruct((B, C_out, Lp), jnp.float32),
        grid=(B, n_l),
        in_specs=[
            # previous L tile of x (halo); clamped at l==0 (its content is masked)
            pl.BlockSpec((None, C_in, TL),
                         lambda b, l: (b, 0, jnp.maximum(l - 1, 0))),
            # current L tile of x
            pl.BlockSpec((None, C_in, TL), lambda b, l: (b, 0, l)),
            _wspec((C_out, K * C_in)),     # w1 (taps folded)
            _wspec((C_out, 1)),            # b1
            _wspec((C_out, K * C_out)),    # w2 (taps folded)
            _wspec((C_out, 1)),            # b2
            _wspec((C_out, C_in)),         # wd (1x1 downsample)
            _wspec((C_out, 1)),            # bd
        ],
        out_specs=pl.BlockSpec((None, C_out, TL), lambda b, l: (b, 0, l)),
        scratch_shapes=[
            pltpu.VMEM((C_in, 2 * TL), compute_dtype),      # xs  [prev|cur]
            pltpu.VMEM((C_out, N1), compute_dtype),         # h   hidden + halo
            pltpu.VMEM((K * C_in, N1), compute_dtype),      # p1  im2col dcc1
            pltpu.VMEM((K * C_out, TL), compute_dtype),     # p2  im2col dcc2
        ],
        compiler_params=pltpu.CompilerParams(
            dimension_semantics=("parallel", "parallel")),
    )(x_p, x_p, w1f, b1c, w2f, b2c, wdf, bdc)

    return out[:, :, :L]


def _weight_norm(v, g):
    """PyTorch weight_norm: w = g * v / ||v||, norm over all dims except dim 0."""
    norm = jnp.sqrt(jnp.sum(v * v, axis=(1, 2), keepdims=True))
    return g * v / norm


def _reference_forward(x, w1, b1, w2, b2, wd, bd, *, dilation):
    """Pure-JAX reference of TemporalBlock.forward (eval mode)."""
    K = w1.shape[2]
    pad = dilation * (K - 1)

    def causal_conv(inp, w, b):
        xp = jnp.pad(inp, ((0, 0), (0, 0), (pad, 0)))
        out = lax.conv_general_dilated(
            xp, w, window_strides=(1,), padding="VALID",
            rhs_dilation=(dilation,), dimension_numbers=("NCH", "OIH", "NCH"))
        return out + b[None, :, None]

    h1 = jax.nn.relu(causal_conv(x, w1, b1))
    h2 = jax.nn.relu(causal_conv(h1, w2, b2))
    res = jnp.einsum("oi,bil->bol", wd[:, :, 0], x) + bd[None, :, None]
    return jax.nn.relu(h2 + res)


if __name__ == "__main__":
    # Small shapes consistent with the module (Conv1d inputs are (N, C, L)).
    B, C_in, C_out, L = 2, 4, 8, 16
    K, dilation = 3, 2

    key = jax.random.PRNGKey(0)
    ks = jax.random.split(key, 9)

    # weight_norm parameterization (v, g) for dcc1 / dcc2; plain weights otherwise.
    w1_v = jax.random.normal(ks[0], (C_out, C_in, K), jnp.float32) * 0.05
    w1_g = jax.random.uniform(ks[1], (C_out, 1, 1), jnp.float32, 0.5, 1.5)
    b1 = jax.random.normal(ks[2], (C_out,), jnp.float32) * 1e-3
    w2_v = jax.random.normal(ks[3], (C_out, C_out, K), jnp.float32) * 0.05
    w2_g = jax.random.uniform(ks[4], (C_out, 1, 1), jnp.float32, 0.5, 1.5)
    b2 = jax.random.normal(ks[5], (C_out,), jnp.float32) * 1e-3
    wd = jax.random.normal(ks[6], (C_out, C_in, 1), jnp.float32) * 0.05
    bd = jax.random.normal(ks[7], (C_out,), jnp.float32) * 1e-3
    x = jax.random.normal(ks[8], (B, C_in, L), jnp.float32)

    # Effective weights after weight_norm reparameterization (JAX glue).
    w1 = _weight_norm(w1_v, w1_g)
    w2 = _weight_norm(w2_v, w2_g)

    ref = _reference_forward(x, w1, b1, w2, b2, wd, bd, dilation=dilation)

    # 1) f32-operand path: tight check against the f32 reference.
    out_f32 = jax.block_until_ready(
        temporal_block_forward(x, w1, b1, w2, b2, wd, bd,
                               dilation=dilation, compute_dtype=jnp.float32))
    assert out_f32.shape == (B, C_out, L), out_f32.shape
    assert jnp.allclose(out_f32, ref, rtol=1e-4, atol=1e-5), \
        f"f32 max abs err = {jnp.max(jnp.abs(out_f32 - ref))}"

    # 2) bf16 MXU-operand path (f32 accumulation / f32 epilogue): looser check.
    out_bf16 = jax.block_until_ready(
        temporal_block_forward(x, w1, b1, w2, b2, wd, bd,
                               dilation=dilation, compute_dtype=jnp.bfloat16))
    assert jnp.allclose(out_bf16, ref, rtol=1e-1, atol=1e-1), \
        f"bf16 max abs err = {jnp.max(jnp.abs(out_bf16 - ref))}"

    # 3) multi-L-tile path (exercises the causal halo carried from the previous tile).
    L2, d2 = 300, 8
    x2 = jax.random.normal(jax.random.PRNGKey(1), (B, C_in, L2), jnp.float32)
    ref2 = _reference_forward(x2, w1, b1, w2, b2, wd, bd, dilation=d2)
    out2 = jax.block_until_ready(
        temporal_block_forward(x2, w1, b1, w2, b2, wd, bd,
                               dilation=d2, compute_dtype=jnp.float32, l_tile=128))
    assert jnp.allclose(out2, ref2, rtol=1e-4, atol=1e-5), \
        f"multi-tile max abs err = {jnp.max(jnp.abs(out2 - ref2))}"

    print("KERNEL_OK")
</pallas_src>

<mosaic_0001>
module attributes {stable_mosaic.version = 11 : i64} {
  func.func @_temporal_block_kernel(%arg0: i32, %arg1: i32, %arg2: memref<1x4x128xf32, #tpu.memory_space<vmem>>, %arg3: memref<1x4x128xf32, #tpu.memory_space<vmem>>, %arg4: memref<8x12xf32, #tpu.memory_space<vmem>>, %arg5: memref<8x1xf32, #tpu.memory_space<vmem>>, %arg6: memref<8x24xf32, #tpu.memory_space<vmem>>, %arg7: memref<8x1xf32, #tpu.memory_space<vmem>>, %arg8: memref<8x4xf32, #tpu.memory_space<vmem>>, %arg9: memref<8x1xf32, #tpu.memory_space<vmem>>, %arg10: memref<1x8x128xf32, #tpu.memory_space<vmem>>, %arg11: memref<4x256xf32, #tpu.memory_space<vmem>>, %arg12: memref<8x132xf32, #tpu.memory_space<vmem>>, %arg13: memref<12x132xf32, #tpu.memory_space<vmem>>, %arg14: memref<24x128xf32, #tpu.memory_space<vmem>>) attributes {dimension_semantics = [#tpu.dimension_semantics<parallel>, #tpu.dimension_semantics<parallel>], iteration_bounds = array<i64: 2, 1>, scalar_prefetch = 0 : i64, scratch_operands = 4 : i64, tpu.core_type = #tpu.core_type<tc>, window_params = [{transform_indices = @transform_0, window_bounds = array<i64: 1, 4, 128>}, {transform_indices = @transform_1, window_bounds = array<i64: 1, 4, 128>}, {pipeline_mode = #tpu.pipeline_mode<synchronous>, transform_indices = @transform_2, window_bounds = array<i64: 8, 12>}, {pipeline_mode = #tpu.pipeline_mode<synchronous>, transform_indices = @transform_3, window_bounds = array<i64: 8, 1>}, {pipeline_mode = #tpu.pipeline_mode<synchronous>, transform_indices = @transform_4, window_bounds = array<i64: 8, 24>}, {pipeline_mode = #tpu.pipeline_mode<synchronous>, transform_indices = @transform_5, window_bounds = array<i64: 8, 1>}, {pipeline_mode = #tpu.pipeline_mode<synchronous>, transform_indices = @transform_6, window_bounds = array<i64: 8, 4>}, {pipeline_mode = #tpu.pipeline_mode<synchronous>, transform_indices = @transform_7, window_bounds = array<i64: 8, 1>}, {transform_indices = @transform_8, window_bounds = array<i64: 1, 8, 128>}]} {
    %c0_i32 = arith.constant 0 : i32
    %0 = arith.cmpi eq, %arg1, %c0_i32 : i32
    %1 = arith.extui %0 : i1 to i32
    %c0_i32_0 = arith.constant 0 : i32
    %2 = arith.cmpi ne, %1, %c0_i32_0 : i32
    scf.if %2 {
      %cst_54 = arith.constant 0.000000e+00 : f32
      %59 = vector.broadcast %cst_54 : f32 to vector<4x128xf32>
      %c0_55 = arith.constant 0 : index
      %c0_56 = arith.constant 0 : index
      %60 = vector.load %arg11[%c0_55, %c0_56] : memref<4x256xf32, #tpu.memory_space<vmem>>, vector<4x128xf32>
      tpu.vector_store %arg11[%c0_55, %c0_56], %59 {strides = array<i32>} : memref<4x256xf32, #tpu.memory_space<vmem>>, vector<4x128xf32>,
    } else {
    }
    %c0_i32_1 = arith.constant 0 : i32
    %3 = arith.cmpi sgt, %arg1, %c0_i32_1 : i32
    %4 = arith.extui %3 : i1 to i32
    %c0_i32_2 = arith.constant 0 : i32
    %5 = arith.cmpi ne, %4, %c0_i32_2 : i32
    scf.if %5 {
      %c0_54 = arith.constant 0 : index
      %c0_55 = arith.constant 0 : index
      %c0_56 = arith.constant 0 : index
      %59 = vector.load %arg2[%c0_54, %c0_55, %c0_56] : memref<1x4x128xf32, #tpu.memory_space<vmem>>, vector<1x4x128xf32>
      %60 = vector.shape_cast %59 : vector<1x4x128xf32> to vector<4x128xf32>
      %c0_57 = arith.constant 0 : index
      %c0_58 = arith.constant 0 : index
      %61 = vector.load %arg11[%c0_57, %c0_58] : memref<4x256xf32, #tpu.memory_space<vmem>>, vector<4x128xf32>
      tpu.vector_store %arg11[%c0_57, %c0_58], %60 {strides = array<i32>} : memref<4x256xf32, #tpu.memory_space<vmem>>, vector<4x128xf32>,
    } else {
    }
    %c0 = arith.constant 0 : index
    %c0_3 = arith.constant 0 : index
    %c0_4 = arith.constant 0 : index
    %6 = vector.load %arg3[%c0, %c0_3, %c0_4] : memref<1x4x128xf32, #tpu.memory_space<vmem>>, vector<1x4x128xf32>
    %7 = vector.shape_cast %6 : vector<1x4x128xf32> to vector<4x128xf32>
    %c0_5 = arith.constant 0 : index
    %c128 = arith.constant 128 : index
    %8 = vector.load %arg11[%c0_5, %c128] : memref<4x256xf32, #tpu.memory_space<vmem>>, vector<4x128xf32>
    tpu.vector_store %arg11[%c0_5, %c128], %7 {strides = array<i32>} : memref<4x256xf32, #tpu.memory_space<vmem>>, vector<4x128xf32>,
    %c0_6 = arith.constant 0 : index
    %c120 = arith.constant 120 : index
    %9 = vector.load %arg11[%c0_6, %c120] : memref<4x256xf32, #tpu.memory_space<vmem>>, vector<4x132xf32>
    %c0_7 = arith.constant 0 : index
    %c0_8 = arith.constant 0 : index
    %10 = vector.load %arg13[%c0_7, %c0_8] : memref<12x132xf32, #tpu.memory_space<vmem>>, vector<4x132xf32>
    tpu.vector_store %arg13[%c0_7, %c0_8], %9 {strides = array<i32>} : memref<12x132xf32, #tpu.memory_space<vmem>>, vector<4x132xf32>,
    %c0_9 = arith.constant 0 : index
    %c122 = arith.constant 122 : index
    %11 = vector.load %arg11[%c0_9, %c122] : memref<4x256xf32, #tpu.memory_space<vmem>>, vector<4x132xf32>
    %c4 = arith.constant 4 : index
    %c0_10 = arith.constant 0 : index
    %12 = vector.load %arg13[%c4, %c0_10] : memref<12x132xf32, #tpu.memory_space<vmem>>, vector<4x132xf32>
    tpu.vector_store %arg13[%c4, %c0_10], %11 {strides = array<i32>} : memref<12x132xf32, #tpu.memory_space<vmem>>, vector<4x132xf32>,
    %c0_11 = arith.constant 0 : index
    %c124 = arith.constant 124 : index
    %13 = vector.load %arg11[%c0_11, %c124] : memref<4x256xf32, #tpu.memory_space<vmem>>, vector<4x132xf32>
    %c8 = arith.constant 8 : index
    %c0_12 = arith.constant 0 : index
    %14 = vector.load %arg13[%c8, %c0_12] : memref<12x132xf32, #tpu.memory_space<vmem>>, vector<4x132xf32>
    tpu.vector_store %arg13[%c8, %c0_12], %13 {strides = array<i32>} : memref<12x132xf32, #tpu.memory_space<vmem>>, vector<4x132xf32>,
    %c0_13 = arith.constant 0 : index
    %c0_14 = arith.constant 0 : index
    %15 = vector.load %arg4[%c0_13, %c0_14] : memref<8x12xf32, #tpu.memory_space<vmem>>, vector<8x12xf32>
    %c0_15 = arith.constant 0 : index
    %c0_16 = arith.constant 0 : index
    %16 = vector.load %arg13[%c0_15, %c0_16] : memref<12x132xf32, #tpu.memory_space<vmem>>, vector<12x132xf32>
    %cst = arith.constant dense<0.000000e+00> : vector<8x132xf32>
    %17 = tpu.matmul %15, %16, %cst {dimension_numbers = #tpu.dot_dimension_numbers<[1], [0], [0], [1], [0, 0, 1, 1], [], []>} : vector<8x12xf32>, vector<12x132xf32>, vector<8x132xf32> -> vector<8x132xf32>
    %c0_17 = arith.constant 0 : index
    %c0_18 = arith.constant 0 : index
    %18 = vector.load %arg5[%c0_17, %c0_18] : memref<8x1xf32, #tpu.memory_space<vmem>>, vector<8x1xf32>
    %19 = vector.broadcast %18 : vector<8x1xf32> to vector<8x132xf32>
    %20 = arith.addf %17, %19 : vector<8x132xf32>
    %cst_19 = arith.constant 0.000000e+00 : f32
    %21 = vector.broadcast %cst_19 : f32 to vector<8x132xf32>
    %22 = arith.maximumf %20, %21 : vector<8x132xf32>
    %23 = tpu.iota {dimensions = array<i32: 1>} : vector<8x132xi32>
    %c4_i32 = arith.constant 4 : i32
    %24 = vector.broadcast %c4_i32 : i32 to vector<8x132xi32>
    %25 = arith.cmpi sge, %23, %24 : vector<8x132xi32>
    %c0_i32_20 = arith.constant 0 : i32
    %26 = arith.cmpi sgt, %arg1, %c0_i32_20 : i32
    %27 = vector.broadcast %26 : i1 to vector<8x132xi1>
    %28 = arith.ori %25, %27 : vector<8x132xi1>
    %cst_21 = arith.constant 0.000000e+00 : f32
    %29 = vector.broadcast %cst_21 : f32 to vector<8x132xf32>
    %30 = arith.select %28, %22, %29 : vector<8x132xi1>, vector<8x132xf32>
    %c0_22 = arith.constant 0 : index
    %c0_23 = arith.constant 0 : index
    %31 = vector.load %arg12[%c0_22, %c0_23] : memref<8x132xf32, #tpu.memory_space<vmem>>, vector<8x132xf32>
    tpu.vector_store %arg12[%c0_22, %c0_23], %30 {strides = array<i32>} : memref<8x132xf32, #tpu.memory_space<vmem>>, vector<8x132xf32>,
    %c0_24 = arith.constant 0 : index
    %c0_25 = arith.constant 0 : index
    %32 = vector.load %arg12[%c0_24, %c0_25] : memref<8x132xf32, #tpu.memory_space<vmem>>, vector<8x128xf32>
    %c0_26 = arith.constant 0 : index
    %c0_27 = arith.constant 0 : index
    %33 = vector.load %arg14[%c0_26, %c0_27] : memref<24x128xf32, #tpu.memory_space<vmem>>, vector<8x128xf32>
    tpu.vector_store %arg14[%c0_26, %c0_27], %32 {strides = array<i32>} : memref<24x128xf32, #tpu.memory_space<vmem>>, vector<8x128xf32>,
    %c0_28 = arith.constant 0 : index
    %c2 = arith.constant 2 : index
    %34 = vector.load %arg12[%c0_28, %c2] : memref<8x132xf32, #tpu.memory_space<vmem>>, vector<8x128xf32>
    %c8_29 = arith.constant 8 : index
    %c0_30 = arith.constant 0 : index
    %35 = vector.load %arg14[%c8_29, %c0_30] : memref<24x128xf32, #tpu.memory_space<vmem>>, vector<8x128xf32>
    tpu.vector_store %arg14[%c8_29, %c0_30], %34 {strides = array<i32>} : memref<24x128xf32, #tpu.memory_space<vmem>>, vector<8x128xf32>,
    %c0_31 = arith.constant 0 : index
    %c4_32 = arith.constant 4 : index
    %36 = vector.load %arg12[%c0_31, %c4_32] : memref<8x132xf32, #tpu.memory_space<vmem>>, vector<8x128xf32>
    %c16 = arith.constant 16 : index
    %c0_33 = arith.constant 0 : index
    %37 = vector.load %arg14[%c16, %c0_33] : memref<24x128xf32, #tpu.memory_space<vmem>>, vector<8x128xf32>
    tpu.vector_store %arg14[%c16, %c0_33], %36 {strides = array<i32>} : memref<24x128xf32, #tpu.memory_space<vmem>>, vector<8x128xf32>,
    %c0_34 = arith.constant 0 : index
    %c0_35 = arith.constant 0 : index
    %38 = vector.load %arg6[%c0_34, %c0_35] : memref<8x24xf32, #tpu.memory_space<vmem>>, vector<8x24xf32>
    %c0_36 = arith.constant 0 : index
    %c0_37 = arith.constant 0 : index
    %39 = vector.load %arg14[%c0_36, %c0_37] : memref<24x128xf32, #tpu.memory_space<vmem>>, vector<24x128xf32>
    %cst_38 = arith.constant dense<0.000000e+00> : vector<8x128xf32>
    %40 = tpu.matmul %38, %39, %cst_38 {dimension_numbers = #tpu.dot_dimension_numbers<[1], [0], [0], [1], [0, 0, 1, 1], [], []>} : vector<8x24xf32>, vector<24x128xf32>, vector<8x128xf32> -> vector<8x128xf32>
    %c0_39 = arith.constant 0 : index
    %c0_40 = arith.constant 0 : index
    %41 = vector.load %arg7[%c0_39, %c0_40] : memref<8x1xf32, #tpu.memory_space<vmem>>, vector<8x1xf32>
    %42 = vector.broadcast %41 : vector<8x1xf32> to vector<8x128xf32>
    %43 = arith.addf %40, %42 : vector<8x128xf32>
    %cst_41 = arith.constant 0.000000e+00 : f32
    %44 = vector.broadcast %cst_41 : f32 to vector<8x128xf32>
    %45 = arith.maximumf %43, %44 : vector<8x128xf32>
    %c0_42 = arith.constant 0 : index
    %c0_43 = arith.constant 0 : index
    %46 = vector.load %arg8[%c0_42, %c0_43] : memref<8x4xf32, #tpu.memory_space<vmem>>, vector<8x4xf32>
    %c0_44 = arith.constant 0 : index
    %c0_45 = arith.constant 0 : index
    %c0_46 = arith.constant 0 : index
    %47 = vector.load %arg3[%c0_44, %c0_45, %c0_46] : memref<1x4x128xf32, #tpu.memory_space<vmem>>, vector<1x4x128xf32>
    %48 = vector.shape_cast %47 : vector<1x4x128xf32> to vector<4x128xf32>
    %cst_47 = arith.constant dense<0.000000e+00> : vector<8x128xf32>
    %49 = tpu.matmul %46, %48, %cst_47 {dimension_numbers = #tpu.dot_dimension_numbers<[1], [0], [0], [1], [0, 0, 1, 1], [], []>} : vector<8x4xf32>, vector<4x128xf32>, vector<8x128xf32> -> vector<8x128xf32>
    %c0_48 = arith.constant 0 : index
    %c0_49 = arith.constant 0 : index
    %50 = vector.load %arg9[%c0_48, %c0_49] : memref<8x1xf32, #tpu.memory_space<vmem>>, vector<8x1xf32>
    %51 = vector.broadcast %50 : vector<8x1xf32> to vector<8x128xf32>
    %52 = arith.addf %49, %51 : vector<8x128xf32>
    %53 = arith.addf %45, %52 : vector<8x128xf32>
    %cst_50 = arith.constant 0.000000e+00 : f32
    %54 = vector.broadcast %cst_50 : f32 to vector<8x128xf32>
    %55 = arith.maximumf %53, %54 : vector<8x128xf32>
    %c0_51 = arith.constant 0 : index
    %c0_52 = arith.constant 0 : index
    %c0_53 = arith.constant 0 : index
    %56 = vector.load %arg10[%c0_51, %c0_52, %c0_53] : memref<1x8x128xf32, #tpu.memory_space<vmem>>, vector<1x8x128xf32>
    %57 = vector.shape_cast %56 : vector<1x8x128xf32> to vector<8x128xf32>
    %58 = vector.shape_cast %55 : vector<8x128xf32> to vector<1x8x128xf32>
    tpu.vector_store %arg10[%c0_51, %c0_52, %c0_53], %58 {strides = array<i32>} : memref<1x8x128xf32, #tpu.memory_space<vmem>>, vector<1x8x128xf32>,
    return
  }
  func.func @transform_0(%arg0: i32, %arg1: i32) -> (i32, i32, i32) {
    %c1_i32 = arith.constant 1 : i32
    %0 = arith.subi %arg1, %c1_i32 : i32
    %c0_i32 = arith.constant 0 : i32
    %1 = arith.maxsi %0, %c0_i32 : i32
    %c0_i32_0 = arith.constant 0 : i32
    %c0_i32_1 = arith.constant 0 : i32
    return %arg0, %c0_i32_0, %1 : i32, i32, i32
  }
  func.func @transform_1(%arg0: i32, %arg1: i32) -> (i32, i32, i32) {
    %c0_i32 = arith.constant 0 : i32
    %c0_i32_0 = arith.constant 0 : i32
    return %arg0, %c0_i32, %arg1 : i32, i32, i32
  }
  func.func @transform_2(%arg0: i32, %arg1: i32) -> (i32, i32) {
    %c0_i32 = arith.constant 0 : i32
    %c0_i32_0 = arith.constant 0 : i32
    %c0_i32_1 = arith.constant 0 : i32
    return %c0_i32, %c0_i32_0 : i32, i32
  }
  func.func @transform_3(%arg0: i32, %arg1: i32) -> (i32, i32) {
    %c0_i32 = arith.constant 0 : i32
    %c0_i32_0 = arith.constant 0 : i32
    %c0_i32_1 = arith.constant 0 : i32
    return %c0_i32, %c0_i32_0 : i32, i32
  }
  func.func @transform_4(%arg0: i32, %arg1: i32) -> (i32, i32) {
    %c0_i32 = arith.constant 0 : i32
    %c0_i32_0 = arith.constant 0 : i32
    %c0_i32_1 = arith.constant 0 : i32
    return %c0_i32, %c0_i32_0 : i32, i32
  }
  func.func @transform_5(%arg0: i32, %arg1: i32) -> (i32, i32) {
    %c0_i32 = arith.constant 0 : i32
    %c0_i32_0 = arith.constant 0 : i32
    %c0_i32_1 = arith.constant 0 : i32
    return %c0_i32, %c0_i32_0 : i32, i32
  }
  func.func @transform_6(%arg0: i32, %arg1: i32) -> (i32, i32) {
    %c0_i32 = arith.constant 0 : i32
    %c0_i32_0 = arith.constant 0 : i32
    %c0_i32_1 = arith.constant 0 : i32
    return %c0_i32, %c0_i32_0 : i32, i32
  }
  func.func @transform_7(%arg0: i32, %arg1: i32) -> (i32, i32) {
    %c0_i32 = arith.constant 0 : i32
    %c0_i32_0 = arith.constant 0 : i32
    %c0_i32_1 = arith.constant 0 : i32
    return %c0_i32, %c0_i32_0 : i32, i32
  }
  func.func @transform_8(%arg0: i32, %arg1: i32) -> (i32, i32, i32) {
    %c0_i32 = arith.constant 0 : i32
    %c0_i32_0 = arith.constant 0 : i32
    return %arg0, %c0_i32, %arg1 : i32, i32, i32
  }
}

</mosaic_0001>

<llo_original>
// kernel: tpu_custom_call.1
$region0: #{tpu_custom_call.1}
  #allocation0 [shape = 'u32[]', space=smem, size = 0x4, offset = 0x4, fixed_abs, tag = 'smem constant byte address 0x4 - core index']
  #allocation1 [shape = 'u32[144,128]{1,0:T(1,128)}', space=vmem, size = 0x12000, scoped, tag = 'internal scratch']
  #allocation2 [shape = 'f32[4,256]{1,0:T(4,128)}', space=vmem, size = 0x1000, scoped, tag = 'scratch operand']
  #allocation3 [shape = 'f32[8,132]{1,0:T(8,128)}', space=vmem, size = 0x2000, scoped, tag = 'scratch operand']
  #allocation4 [shape = 'f32[12,132]{1,0:T(8,128)}', space=vmem, size = 0x4000, scoped, tag = 'scratch operand']
  #allocation5 [shape = 'f32[24,128]{1,0:T(8,128)}', space=vmem, size = 0x3000, scoped, tag = 'scratch operand']
  %s0 = inlined_call_operand.vmem [shape: f32[2,4,128], index: 0, kind: input, shape index: {}]
  %s1 = inlined_call_operand.vmem [shape: f32[2,4,128], index: 1, kind: input, shape index: {}]
  %s2 = inlined_call_operand.vmem [shape: f32[8,12], index: 2, kind: input, shape index: {}]
  %s3 = inlined_call_operand.vmem [shape: f32[8,1], index: 3, kind: input, shape index: {}]
  %s4 = inlined_call_operand.vmem [shape: f32[8,24], index: 4, kind: input, shape index: {}]
  %s5 = inlined_call_operand.vmem [shape: f32[8,1], index: 5, kind: input, shape index: {}]
  %s6 = inlined_call_operand.vmem [shape: f32[8,4], index: 6, kind: input, shape index: {}]
  %s7 = inlined_call_operand.vmem [shape: f32[8,1], index: 7, kind: input, shape index: {}]
  %s8 = inlined_call_operand.hbm [shape: f32[2,8,128], index: 8, kind: output, shape index: {}]
  %s9 = sld [smem:[#allocation0]]
  $region73: #{tpu_custom_call.1} parent=0
    _
  %s11 = ssub.s32 1, %s9
  %s12 = scalar_select 0, %s11, %s9
  $region1: #{tpu_custom_call.1} parent=0
    #allocation6 [shape = 'u8[8192]{0}', space=vmem, size = 0x2000, scoped, tag = 'output window, operand 0']
    #allocation7 [shape = 's32[2]{0}', space=sflag, size = 0x8, scoped, tag = 'scoped memory for tpu_custom_call.1']
    %13 = vsyncpa [#allocation7], 0
    %s14 = scalar_lea.sflag [#allocation7], 1
    %15 = vsyncpa %s14, 0
    loop: start=0, step=1, limit=4
    $region2: #{tpu_custom_call.1} parent=1 // loop_pre_header
      _
    $region3: #{tpu_custom_call.1} parent=1 // loop_header
      %s17 = sphi 0, %s21
      %p18 = scmp.ge.s32.totalorder %s17, 4
      %s24 = sphi 0, %s36
      %s25 = sphi 0, %s32
      %s26 = sphi 0, %s24
      %s27 = sphi 0, %s25
      %s28 = sphi 0, %s26
      %s29 = sphi 0, %s27
      %s47 = sphi 0, %s49
      %s50 = sphi 0, %s47
      %s51 = sphi 0, %s50
      %s67 = sphi 0, %s51
      %s75 = sphi 0, %s77
      %s78 = sphi 0, %s75
      %s79 = sphi 0, %s78
      %s95 = sphi 0, %s79
      %s99 = sphi 0, %s99
      %s101 = sphi 0, %s99
      %s102 = sphi 0, %s101
      %s116 = sphi 0, %s102
      %s120 = sphi 0, %s120
      %s122 = sphi 0, %s120
      %s123 = sphi 0, %s122
      %s137 = sphi 0, %s123
      %s141 = sphi 0, %s141
      %s143 = sphi 0, %s141
      %s144 = sphi 0, %s143
      %s158 = sphi 0, %s144
      %s162 = sphi 0, %s162
      %s164 = sphi 0, %s162
      %s165 = sphi 0, %s164
      %s179 = sphi 0, %s165
      %s183 = sphi 0, %s183
      %s185 = sphi 0, %s183
      %s186 = sphi 0, %s185
      %s200 = sphi 0, %s186
      %s204 = sphi 0, %s204
      %s206 = sphi 0, %s204
      %s207 = sphi 0, %s206
      %s221 = sphi 0, %s207
      %s229 = sphi 0, %s231
      %s232 = sphi 0, %s229
      %s233 = sphi 0, %s232
      %s249 = sphi 0, %s233
    $region4: #{tpu_custom_call.1} parent=1 // loop_header_branch
      %20 = sbr.rel (%p18) target = $region8
    $region5: #{tpu_custom_call.1} parent=1 // loop_body
      %s22 = ssub.s32 %s17, 1
      %s23 = ssub.s32 %s17, 2
      %s30 = sadd.s32 1, %s25
      %p31 = scmp.ge.s32.totalorder %s30, 1
      %s32 = scalar_select %p31, 0, %s30
      %s33 = sadd.s32 1, %s24
      %s34 = scalar_select %p31, %s33, %s24
      %p35 = scmp.ge.s32.totalorder %s34, 2
      %s36 = scalar_select %p35, 0, %s34
      %s37 = ssub.s32 %s25, 1
      %p38 = scmp.gt.s32.totalorder %s37, 0
      %s39 = scalar_select %p38, %s37, 0
      %s40 = ssub.s32 %s32, 1
      %p41 = scmp.gt.s32.totalorder %s40, 0
      %s42 = scalar_select %p41, %s40, 0
      %s43 = ssub.s32 %s24, %s36
      %s44 = ssub.s32 %s39, %s42
      %s45 = sor.u32 %s43, %s44
      %p46 = scmp.eq.s32.totalorder %s45, 0
      %s48 = sadd.s32 %s47, 1
      %s49 = scalar_select %p46, %s47, %s48
      %p52 = pneg %p46
      %p53 = scmp.eq.s32.totalorder %s17, 1
      %p54 = por %p52, %p53
      %p55 = scmp.ne.s32.totalorder %s47, %s50
      %p56 = scmp.eq.s32.totalorder %s17, 0
      %p57 = por %p55, %p56
      %p58 = scmp.ne.s32.totalorder %s47, %s50
      %p59 = scmp.eq.s32.totalorder %s22, 1
      %p60 = por %p58, %p59
      %p61 = scmp.ne.s32.totalorder %s50, %s51
      %p62 = scmp.eq.s32.totalorder %s22, 0
      %p63 = por %p61, %p62
      %p64 = scmp.ne.s32.totalorder %s50, %s51
      %p65 = scmp.eq.s32.totalorder %s23, 1
      %p66 = por %p64, %p65
      %p68 = scmp.ne.s32.totalorder %s51, %s67
      %p69 = scmp.eq.s32.totalorder %s23, 0
      %p70 = por %p68, %p69
      %s71 = ssub.s32 %s24, %s36
      %s72 = ssub.s32 %s25, %s32
      %s73 = sor.u32 %s71, %s72
      %p74 = scmp.eq.s32.totalorder %s73, 0
      %s76 = sadd.s32 %s75, 1
      %s77 = scalar_select %p74, %s75, %s76
      %p80 = pneg %p74
      %p81 = scmp.eq.s32.totalorder %s17, 1
      %p82 = por %p80, %p81
      %p83 = scmp.ne.s32.totalorder %s75, %s78
      %p84 = scmp.eq.s32.totalorder %s17, 0
      %p85 = por %p83, %p84
      %p86 = scmp.ne.s32.totalorder %s75, %s78
      %p87 = scmp.eq.s32.totalorder %s22, 1
      %p88 = por %p86, %p87
      %p89 = scmp.ne.s32.totalorder %s78, %s79
      %p90 = scmp.eq.s32.totalorder %s22, 0
      %p91 = por %p89, %p90
      %p92 = scmp.ne.s32.totalorder %s78, %s79
      %p93 = scmp.eq.s32.totalorder %s23, 1
      %p94 = por %p92, %p93
      %p96 = scmp.ne.s32.totalorder %s79, %s95
      %p97 = scmp.eq.s32.totalorder %s23, 0
      %p98 = por %p96, %p97
      %s100 = sadd.s32 %s99, 1
      %p103 = scmp.eq.s32.totalorder %s17, 1
      %p104 = scmp.ne.s32.totalorder %s99, %s101
      %p105 = scmp.eq.s32.totalorder %s17, 0
      %p106 = por %p104, %p105
      %p107 = scmp.ne.s32.totalorder %s99, %s101
      %p108 = scmp.eq.s32.totalorder %s22, 1
      %p109 = por %p107, %p108
      %p110 = scmp.ne.s32.totalorder %s101, %s102
      %p111 = scmp.eq.s32.totalorder %s22, 0
      %p112 = por %p110, %p111
      %p113 = scmp.ne.s32.totalorder %s101, %s102
      %p114 = scmp.eq.s32.totalorder %s23, 1
      %p115 = por %p113, %p114
      %p117 = scmp.ne.s32.totalorder %s102, %s116
      %p118 = scmp.eq.s32.totalorder %s23, 0
      %p119 = por %p117, %p118
      %s121 = sadd.s32 %s120, 1
      %p124 = scmp.eq.s32.totalorder %s17, 1
      %p125 = scmp.ne.s32.totalorder %s120, %s122
      %p126 = scmp.eq.s32.totalorder %s17, 0
      %p127 = por %p125, %p126
      %p128 = scmp.ne.s32.totalorder %s120, %s122
      %p129 = scmp.eq.s32.totalorder %s22, 1
      %p130 = por %p128, %p129
      %p131 = scmp.ne.s32.totalorder %s122, %s123
      %p132 = scmp.eq.s32.totalorder %s22, 0
      %p133 = por %p131, %p132
      %p134 = scmp.ne.s32.totalorder %s122, %s123
      %p135 = scmp.eq.s32.totalorder %s23, 1
      %p136 = por %p134, %p135
      %p138 = scmp.ne.s32.totalorder %s123, %s137
      %p139 = scmp.eq.s32.totalorder %s23, 0
      %p140 = por %p138, %p139
      %s142 = sadd.s32 %s141, 1
      %p145 = scmp.eq.s32.totalorder %s17, 1
      %p146 = scmp.ne.s32.totalorder %s141, %s143
      %p147 = scmp.eq.s32.totalorder %s17, 0
      %p148 = por %p146, %p147
      %p149 = scmp.ne.s32.totalorder %s141, %s143
      %p150 = scmp.eq.s32.totalorder %s22, 1
      %p151 = por %p149, %p150
      %p152 = scmp.ne.s32.totalorder %s143, %s144
      %p153 = scmp.eq.s32.totalorder %s22, 0
      %p154 = por %p152, %p153
      %p155 = scmp.ne.s32.totalorder %s143, %s144
      %p156 = scmp.eq.s32.totalorder %s23, 1
      %p157 = por %p155, %p156
      %p159 = scmp.ne.s32.totalorder %s144, %s158
      %p160 = scmp.eq.s32.totalorder %s23, 0
      %p161 = por %p159, %p160
      %s163 = sadd.s32 %s162, 1
      %p166 = scmp.eq.s32.totalorder %s17, 1
      %p167 = scmp.ne.s32.totalorder %s162, %s164
      %p168 = scmp.eq.s32.totalorder %s17, 0
      %p169 = por %p167, %p168
      %p170 = scmp.ne.s32.totalorder %s162, %s164
      %p171 = scmp.eq.s32.totalorder %s22, 1
      %p172 = por %p170, %p171
      %p173 = scmp.ne.s32.totalorder %s164, %s165
      %p174 = scmp.eq.s32.totalorder %s22, 0
      %p175 = por %p173, %p174
      %p176 = scmp.ne.s32.totalorder %s164, %s165
      %p177 = scmp.eq.s32.totalorder %s23, 1
      %p178 = por %p176, %p177
      %p180 = scmp.ne.s32.totalorder %s165, %s179
      %p181 = scmp.eq.s32.totalorder %s23, 0
      %p182 = por %p180, %p181
      %s184 = sadd.s32 %s183, 1
      %p187 = scmp.eq.s32.totalorder %s17, 1
      %p188 = scmp.ne.s32.totalorder %s183, %s185
      %p189 = scmp.eq.s32.totalorder %s17, 0
      %p190 = por %p188, %p189
      %p191 = scmp.ne.s32.totalorder %s183, %s185
      %p192 = scmp.eq.s32.totalorder %s22, 1
      %p193 = por %p191, %p192
      %p194 = scmp.ne.s32.totalorder %s185, %s186
      %p195 = scmp.eq.s32.totalorder %s22, 0
      %p196 = por %p194, %p195
      %p197 = scmp.ne.s32.totalorder %s185, %s186
      %p198 = scmp.eq.s32.totalorder %s23, 1
      %p199 = por %p197, %p198
      %p201 = scmp.ne.s32.totalorder %s186, %s200
      %p202 = scmp.eq.s32.totalorder %s23, 0
      %p203 = por %p201, %p202
      %s205 = sadd.s32 %s204, 1
      %p208 = scmp.eq.s32.totalorder %s17, 1
      %p209 = scmp.ne.s32.totalorder %s204, %s206
      %p210 = scmp.eq.s32.totalorder %s17, 0
      %p211 = por %p209, %p210
      %p212 = scmp.ne.s32.totalorder %s204, %s206
      %p213 = scmp.eq.s32.totalorder %s22, 1
      %p214 = por %p212, %p213
      %p215 = scmp.ne.s32.totalorder %s206, %s207
      %p216 = scmp.eq.s32.totalorder %s22, 0
      %p217 = por %p215, %p216
      %p218 = scmp.ne.s32.totalorder %s206, %s207
      %p219 = scmp.eq.s32.totalorder %s23, 1
      %p220 = por %p218, %p219
      %p222 = scmp.ne.s32.totalorder %s207, %s221
      %p223 = scmp.eq.s32.totalorder %s23, 0
      %p224 = por %p222, %p223
      %s225 = ssub.s32 %s24, %s36
      %s226 = ssub.s32 %s25, %s32
      %s227 = sor.u32 %s225, %s226
      %p228 = scmp.eq.s32.totalorder %s227, 0
      %s230 = sadd.s32 %s229, 1
      %s231 = scalar_select %p228, %s229, %s230
      %p234 = pneg %p228
      %p235 = scmp.eq.s32.totalorder %s17, 1
      %p236 = por %p234, %p235
      %p237 = scmp.ne.s32.totalorder %s229, %s232
      %p238 = scmp.eq.s32.totalorder %s17, 0
      %p239 = por %p237, %p238
      %p240 = scmp.ne.s32.totalorder %s229, %s232
      %p241 = scmp.eq.s32.totalorder %s22, 1
      %p242 = por %p240, %p241
      %p243 = scmp.ne.s32.totalorder %s232, %s233
      %p244 = scmp.eq.s32.totalorder %s22, 0
      %p245 = por %p243, %p244
      %p246 = scmp.ne.s32.totalorder %s232, %s233
      %p247 = scmp.eq.s32.totalorder %s23, 1
      %p248 = por %p246, %p247
      %p250 = scmp.ne.s32.totalorder %s233, %s249
      %p251 = scmp.eq.s32.totalorder %s23, 0
      %p252 = por %p250, %p251
      %p253 = scmp.le.s32.totalorder 1, %s17
      %p254 = scmp.lt.s32.totalorder %s17, 3
      %p255 = pnand %p253, %p254
      %p256 = pneg %p255
      // Predicated region
      $region9: #{tpu_custom_call.1} parent=5 // pred_check
        _
      $region10: #{tpu_custom_call.1} parent=5 // pred_check_branch
        %258 = sbr.rel (%p255) target = $region12
      $region11: #{tpu_custom_call.1} parent=5 // pred_region
        %s259 = ssub.s32 %s17, 1
        // Predicated region
        $region13: #{tpu_custom_call.1} parent=11 // pred_check
          %p260 = pneg %p112
        $region14: #{tpu_custom_call.1} parent=11 // pred_check_branch
          %262 = sbr.rel (%p260) target = $region16
        $region15: #{tpu_custom_call.1} parent=11 // pred_region
          _
        $region16: #{tpu_custom_call.1} parent=11 // pred_fallthru
          _
        // Predicated region
        $region17: #{tpu_custom_call.1} parent=11 // pred_check
          %p263 = pneg %p133
        $region18: #{tpu_custom_call.1} parent=11 // pred_check_branch
          %265 = sbr.rel (%p263) target = $region20
        $region19: #{tpu_custom_call.1} parent=11 // pred_region
          _
        $region20: #{tpu_custom_call.1} parent=11 // pred_fallthru
          _
        // Predicated region
        $region21: #{tpu_custom_call.1} parent=11 // pred_check
          %p266 = pneg %p154
        $region22: #{tpu_custom_call.1} parent=11 // pred_check_branch
          %268 = sbr.rel (%p266) target = $region24
        $region23: #{tpu_custom_call.1} parent=11 // pred_region
          _
        $region24: #{tpu_custom_call.1} parent=11 // pred_fallthru
          _
        // Predicated region
        $region25: #{tpu_custom_call.1} parent=11 // pred_check
          %p269 = pneg %p175
        $region26: #{tpu_custom_call.1} parent=11 // pred_check_branch
          %271 = sbr.rel (%p269) target = $region28
        $region27: #{tpu_custom_call.1} parent=11 // pred_region
          _
        $region28: #{tpu_custom_call.1} parent=11 // pred_fallthru
          _
        // Predicated region
        $region29: #{tpu_custom_call.1} parent=11 // pred_check
          %p272 = pneg %p196
        $region30: #{tpu_custom_call.1} parent=11 // pred_check_branch
          %274 = sbr.rel (%p272) target = $region32
        $region31: #{tpu_custom_call.1} parent=11 // pred_region
          _
        $region32: #{tpu_custom_call.1} parent=11 // pred_fallthru
          _
        // Predicated region
        $region33: #{tpu_custom_call.1} parent=11 // pred_check
          %p275 = pneg %p217
        $region34: #{tpu_custom_call.1} parent=11 // pred_check_branch
          %277 = sbr.rel (%p275) target = $region36
        $region35: #{tpu_custom_call.1} parent=11 // pred_region
          _
        $region36: #{tpu_custom_call.1} parent=11 // pred_fallthru
          _
      $region12: #{tpu_custom_call.1} parent=5 // pred_fallthru
        _
      %p278 = scmp.lt.s32.totalorder %s17, 2
      // Predicated region
      $region37: #{tpu_custom_call.1} parent=5 // pred_check
        %p279 = pneg %p278
      $region38: #{tpu_custom_call.1} parent=5 // pred_check_branch
        %281 = sbr.rel (%p279) target = $region40
      $region39: #{tpu_custom_call.1} parent=5 // pred_region
        // Predicated region
        $region41: #{tpu_custom_call.1} parent=39 // pred_check
          %p282 = pneg %p57
        $region42: #{tpu_custom_call.1} parent=39 // pred_check_branch
          %284 = sbr.rel (%p282) target = $region44
        $region43: #{tpu_custom_call.1} parent=39 // pred_region
          %s285 = ssub.s32 %s25, 1
          %p286 = scmp.gt.s32.totalorder %s285, 0
          %s287 = scalar_select %p286, %s285, 0
          %p288 = scmp.lt.s32.totalorder %s24, 1
          %s289 = scalar_select %p288, %s24, 1
          %p290 = scmp.lt.s32.totalorder %s287, 0
          %s291 = scalar_select %p290, %s287, 0
          %s292 = sadd.s32 %s291, %s289
          %s293 = smul.addr %s292, 4
          %s294 = scalar_lea.vmem %s0, %s293
          %s295 = ssub.s32 %s25, 1
          %p296 = scmp.gt.s32.totalorder %s295, 0
          %s297 = scalar_select %p296, %s295, 0
        $region44: #{tpu_custom_call.1} parent=39 // pred_fallthru
          _
        // Predicated region
        $region45: #{tpu_custom_call.1} parent=39 // pred_check
          %p298 = pneg %p85
        $region46: #{tpu_custom_call.1} parent=39 // pred_check_branch
          %300 = sbr.rel (%p298) target = $region48
        $region47: #{tpu_custom_call.1} parent=39 // pred_region
          %p301 = scmp.lt.s32.totalorder %s24, 1
          %s302 = scalar_select %p301, %s24, 1
          %p303 = scmp.lt.s32.totalorder %s25, 0
          %s304 = scalar_select %p303, %s25, 0
          %s305 = sadd.s32 %s304, %s302
          %s306 = smul.addr %s305, 4
          %s307 = scalar_lea.vmem %s1, %s306
        $region48: #{tpu_custom_call.1} parent=39 // pred_fallthru
          _
      $region40: #{tpu_custom_call.1} parent=5 // pred_fallthru
        _
      %p308 = scmp.le.s32.totalorder 1, %s17
      %p309 = scmp.lt.s32.totalorder %s17, 3
      %p310 = pnand %p308, %p309
      %p311 = pneg %p310
      // Predicated region
      $region49: #{tpu_custom_call.1} parent=5 // pred_check
        _
      $region50: #{tpu_custom_call.1} parent=5 // pred_check_branch
        %313 = sbr.rel (%p310) target = $region52
      $region51: #{tpu_custom_call.1} parent=5 // pred_region
        %s314 = ssub.s32 %s17, 1
        %s315 = ssub.s32 %s27, 1
        %p316 = scmp.gt.s32.totalorder %s315, 0
        %s317 = scalar_select %p316, %s315, 0
        %p318 = scmp.lt.s32.totalorder %s26, 1
        %s319 = scalar_select %p318, %s26, 1
        %p320 = scmp.lt.s32.totalorder %s317, 0
        %s321 = scalar_select %p320, %s317, 0
        %s322 = sadd.s32 %s321, %s319
        %s323 = smul.addr %s322, 4
        %s324 = scalar_lea.vmem %s0, %s323
        %p325 = pneg %p63
        %p326 = pneg %p60
        %p327 = scmp.lt.s32.totalorder %s26, 1
        %s328 = scalar_select %p327, %s26, 1
        %p329 = scmp.lt.s32.totalorder %s27, 0
        %s330 = scalar_select %p329, %s27, 0
        %s331 = sadd.s32 %s330, %s328
        %s332 = smul.addr %s331, 4
        %s333 = scalar_lea.vmem %s1, %s332
        %p334 = pneg %p91
        %p335 = pneg %p88
        %p336 = pneg %p112
        %p337 = pneg %p109
        %p338 = pneg %p133
        %p339 = pneg %p130
        %p340 = pneg %p154
        %p341 = pneg %p151
        %p342 = pneg %p175
        %p343 = pneg %p172
        %p344 = pneg %p196
        %p345 = pneg %p193
        %p346 = pneg %p217
        %p347 = pneg %p214
        %p348 = pneg %p245
        %p349 = pneg %p242
        %s350 = sand.u32 %s232, 1
        %s351 = scalar_lea.sflag [#allocation7], %s350
        %s352 = sand.u32 %s232, 1
        %s353 = smul.addr %s352, 8
        %s354 = scalar_lea.vmem [#allocation6], %s353
        %s355 = ssub.s32 %s27, 1
        %p356 = scmp.gt.s32.totalorder %s355, 0
        %s357 = scalar_select %p356, %s355, 0
        %p358 = scmp.lt.s32.totalorder %s26, 1
        %s359 = scalar_select %p358, %s26, 1
        %p360 = scmp.lt.s32.totalorder %s357, 0
        %s361 = scalar_select %p360, %s357, 0
        %s362 = sadd.s32 %s361, %s359
        %s363 = smul.addr %s362, 4
        %s364 = scalar_lea.vmem %s0, %s363
        %s365 = ssub.s32 %s27, 1
        %p366 = scmp.gt.s32.totalorder %s365, 0
        %s367 = scalar_select %p366, %s365, 0
        %p368 = scmp.lt.s32.totalorder %s26, 1
        %s369 = scalar_select %p368, %s26, 1
        %p370 = scmp.lt.s32.totalorder %s27, 0
        %s371 = scalar_select %p370, %s27, 0
        %s372 = sadd.s32 %s371, %s369
        %s373 = smul.addr %s372, 4
        %s374 = scalar_lea.vmem %s1, %s373
        %p375 = scmp.eq.s32.totalorder %s27, 0
        // Predicated region
        $region53: #{tpu_custom_call.1} parent=51 // pred_check
          %p376 = pneg %p375
        $region54: #{tpu_custom_call.1} parent=51 // pred_check_branch
          %378 = sbr.rel (%p376) target = $region56
        $region55: #{tpu_custom_call.1} parent=51 // pred_region
          %379 = vst [vmem:[#allocation2] sm:$0xf] 0.0
        $region56: #{tpu_custom_call.1} parent=51 // pred_fallthru
          _
        %p380 = scmp.gt.s32.totalorder %s27, 0
        // Predicated region
        $region57: #{tpu_custom_call.1} parent=51 // pred_check
          %p381 = pneg %p380
        $region58: #{tpu_custom_call.1} parent=51 // pred_check_branch
          %383 = sbr.rel (%p381) target = $region60
        $region59: #{tpu_custom_call.1} parent=51 // pred_region
          %v384 = vld [vmem:[%s364] sm:$0xf]
          %385 = vst [vmem:[#allocation2] sm:$0xf] %v384
        $region60: #{tpu_custom_call.1} parent=51 // pred_fallthru
          _
        %v386 = vld [vmem:[%s374] sm:$0xf]
        %387 = vst [vmem:[#allocation2 + $0x4] sm:$0xf] %v386
        %v388 = vld [vmem:[#allocation2] sm:$0xff]
        %v390 = vcombine.high %v388, %v388
        %391 = vrot.lane.b32.xlu0 %v388, 8
        %v392 = vpop.permute.xlu0 %391
        %393 = vrot.lane.b32.xlu0 %v390, 8
        %v394 = vpop.permute.xlu0 %393
        %vm395 = vcmask 64512
        %v396 = vsel %vm395, %v392, %v394
        %399 = vst [vmem:[#allocation4] sm:$0xf] %v396
        %vm400 = vcmask 27648
        %401 = vst.msk [vmem:[#allocation4 + $0x8] sm:$0xf] %vm400, %v394
        %v402 = vld [vmem:[#allocation2] sm:$0xff]
        %v404 = vcombine.low %v402, %v402
        %405 = vrot.lane.b32.xlu0 %v404, 6
        %v406 = vpop.permute.xlu0 %405
        %407 = vrot.lane.b32.xlu0 %v402, 6
        %v408 = vpop.permute.xlu0 %407
        %vm409 = vcmask 48128
        %v410 = vsel %vm409, %v406, %v408
        %413 = vst [vmem:[#allocation4] sm:$0xf0] %v410
        %vm414 = vcmask 31748
        %415 = vst.msk [vmem:[#allocation4 + $0x8] sm:$0xf0] %vm414, %v408
        %v416 = vld [vmem:[#allocation2] sm:$0xff]
        %v418 = vcombine.high %v416, %v416
        %419 = vrot.lane.b32.xlu0 %v416, 4
        %v420 = vpop.permute.xlu0 %419
        %421 = vrot.lane.b32.xlu0 %v418, 4
        %v422 = vpop.permute.xlu0 %421
        %vm423 = vcmask 31744
        %v424 = vsel %vm423, %v420, %v422
        %427 = vst [vmem:[#allocation4 + $0x10] sm:$0xf] %v424
        %428 = vst.msk [vmem:[#allocation4 + $0x18] sm:$0xf] %vm400, %v422
        %v429 = vld [vmem:[%s2] sm:$0xff]
        %v430 = vld [vmem:[#allocation4] sm:$0xff]
        %v431 = vld [vmem:[#allocation4 + $0x8] sm:$0xff]
        %v432 = vld [vmem:[#allocation4 + $0x10] sm:$0xf]
        %v433 = vld [vmem:[#allocation4 + $0x18] sm:$0xf]
        %v434 = vld [vmem:[%s3] sm:$0xff]
        %436 = vset.pattern.permute.xlu0 0
        %437 = vperm.xlu0 %436, %v434
        %v438 = vpop.permute.xlu0 %437
        %vm440 = vcmask 97280
        %v442 = vsel %vm440, %v429, 0
        %vm444 = vcmask 1043456
        %v446 = vsel %vm444, %v432, 0
        %v449 = vsel %vm444, %v433, 0
        %451 = vmatprep.subr.mxu0 %v431
        %452 = vmatpush1.msra.mxu0 %v430
        %453 = vmatprep.subr.mxu0 %v449
        %454 = vmatpush1.msra.mxu0 %v446
        %455 = vmatprep.subr.mxu0 0.0
        %456 = vmatpush1.msra.mxu0 0.0
        %457 = vmatprep.subr.mxu0 0.0
        %458 = vmatpush1.msra.mxu0 0.0
        %459 = vmatprep.subr.mxu0 0.0
        %460 = vmatpush1.msra.mxu0 0.0
        %461 = vmatprep.subr.mxu0 0.0
        %462 = vmatpush1.msra.mxu0 0.0
        %463 = vmatprep.subr.mxu0 0.0
        %464 = vmatpush1.msra.mxu0 0.0
        %465 = vmatprep.subr.mxu0 0.0
        %466 = vmatpush1.msra.mxu0 0.0
        %467 = vmatprep.subr.mxu0 0.0
        %468 = vmatpush1.msra.mxu0 0.0
        %469 = vmatprep.subr.mxu0 0.0
        %470 = vmatpush1.msra.mxu0 0.0
        %471 = vmatprep.subr.mxu0 0.0
        %472 = vmatpush1.msra.mxu0 0.0
        %473 = vmatprep.subr.mxu0 0.0
        %474 = vmatpush1.msra.mxu0 0.0
        %475 = vmatprep.subr.mxu0 0.0
        %476 = vmatpush1.msra.mxu0 0.0
        %477 = vmatprep.subr.mxu0 0.0
        %478 = vmatpush1.msra.mxu0 0.0
        %479 = vmatprep.subr.mxu0 0.0
        %480 = vmatpush1.msra.mxu0 0.0
        %481 = vmatprep.subr.mxu0 0.0
        %482 = vmatpush1.msra.mxu0 0.0
        %483 = vmatprep.subr.mxu0 0.0
        %484 = vmatpush1.msra.mxu0 0.0
        %485 = vmatprep.subr.mxu0 0.0
        %486 = vmatpush1.msra.mxu0 0.0
        %487 = vmatprep.subr.mxu0 0.0
        %488 = vmatpush1.msra.mxu0 0.0
        %489 = vmatprep.subr.mxu0 0.0
        %490 = vmatpush1.msra.mxu0 0.0
        %491 = vmatprep.subr.mxu0 0.0
        %492 = vmatpush1.msra.mxu0 0.0
        %493 = vmatprep.subr.mxu0 0.0
        %494 = vmatpush1.msra.mxu0 0.0
        %495 = vmatprep.subr.mxu0 0.0
        %496 = vmatpush1.msra.mxu0 0.0
        %497 = vmatprep.subr.mxu0 0.0
        %498 = vmatpush1.msra.mxu0 0.0
        %499 = vmatprep.subr.mxu0 0.0
        %500 = vmatpush1.msra.mxu0 0.0
        %501 = vmatprep.subr.mxu0 0.0
        %502 = vmatpush1.msra.mxu0 0.0
        %503 = vmatprep.subr.mxu0 0.0
        %504 = vmatpush1.msra.mxu0 0.0
        %505 = vmatprep.subr.mxu0 0.0
        %506 = vmatpush1.msra.mxu0 0.0
        %507 = vmatprep.subr.mxu0 0.0
        %508 = vmatpush1.msra.mxu0 0.0
        %509 = vmatprep.subr.mxu0 0.0
        %510 = vmatpush1.msra.mxu0 0.0
        %511 = vmatprep.subr.mxu0 0.0
        %512 = vmatpush1.msra.mxu0 0.0
        %513 = vmatprep.subr.mxu0 0.0
        %514 = vmatpush1.msra.mxu0 0.0
        %515 = vmatprep.mubr.f32.mxu0 0.0
        %516 = vmatmul.mubr.f32.gmra.mrb[0].mxu0 %v442
        %v517 = vpop.f32.mrb[0].mxu0
        %v518 = vadd.f32 %v438, %v517
        %v519 = vpop.f32.mrb[0].mxu0
        %v520 = vadd.f32 %v438, %v519
        %521 = vdwg.mxu0
        %v522 = vmax.f32 %v518, 0.0
        %v523 = vmax.f32 %v520, 0.0
        %v524 = vlaneseq
        %v525 = vand.u32 %v524, 127
        %v526 = vadd.s32 %v525, 128
        %vm527 = vcmp.ge.s32.totalorder %v525, 4
        %vm528 = vcmp.ge.s32.totalorder %v526, 4
        %s529 = scalar_select %p380, 1, 0
        %v530 = vstv %s529
        %vm531 = vcmp.eq.s32.totalorder %v530, 1
        %vm532 = vmor %vm527, %vm531
        %vm533 = vmor %vm528, %vm531
        %v534 = vsel %vm532, %v522, 0.0
        %v535 = vsel %vm533, %v523, 0.0
        %536 = vst [vmem:[#allocation3] sm:$0xff] %v534
        %537 = vst.msk [vmem:[#allocation3 + $0x8] sm:$0xff] %vm423, %v535
        %v538 = vld [vmem:[#allocation3] sm:$0xff]
        %539 = vst [vmem:[#allocation5] sm:$0xff] %v538
        %v540 = vld [vmem:[#allocation3] sm:$0xff]
        %v541 = vld [vmem:[#allocation3 + $0x8] sm:$0xff]
        %544 = vrot.lane.b32.xlu0 %v540, 126
        %v545 = vpop.permute.xlu0 %544
        %546 = vrot.lane.b32.xlu0 %v541, 126
        %v547 = vpop.permute.xlu0 %546
        %vm548 = vcmask 1031168
        %v549 = vsel %vm548, %v545, %v547
        %551 = vst [vmem:[#allocation5 + $0x8] sm:$0xff] %v549
        %v552 = vld [vmem:[#allocation3] sm:$0xff]
        %v553 = vld [vmem:[#allocation3 + $0x8] sm:$0xff]
        %556 = vrot.lane.b32.xlu0 %v552, 124
        %v557 = vpop.permute.xlu0 %556
        %558 = vrot.lane.b32.xlu0 %v553, 124
        %v559 = vpop.permute.xlu0 %558
        %vm560 = vcmask 1014784
        %v561 = vsel %vm560, %v557, %v559
        %563 = vst [vmem:[#allocation5 + $0x10] sm:$0xff] %v561
        %v564 = vld [vmem:[%s4] sm:$0xff]
        %v565 = vld [vmem:[#allocation5] sm:$0xff]
        %v566 = vld [vmem:[#allocation5 + $0x8] sm:$0xff]
        %v567 = vld [vmem:[#allocation5 + $0x10] sm:$0xff]
        %v568 = vld [vmem:[%s5] sm:$0xff]
        %570 = vset.pattern.permute.xlu0 0
        %571 = vperm.xlu0 %570, %v568
        %v572 = vpop.permute.xlu0 %571
        %vm574 = vcmask 195584
        %v576 = vsel %vm574, %v564, 0
        %578 = vmatprep.subr.mxu0 0.0
        %579 = vmatpush1.msra.mxu0 %v565
        %580 = vmatprep.subr.mxu0 0.0
        %581 = vmatpush1.msra.mxu0 %v566
        %582 = vmatprep.subr.mxu0 0.0
        %583 = vmatpush1.msra.mxu0 %v567
        %584 = vmatprep.subr.mxu0 0.0
        %585 = vmatpush1.msra.mxu0 0.0
        %586 = vmatprep.subr.mxu0 0.0
        %587 = vmatpush1.msra.mxu0 0.0
        %588 = vmatprep.subr.mxu0 0.0
        %589 = vmatpush1.msra.mxu0 0.0
        %590 = vmatprep.subr.mxu0 0.0
        %591 = vmatpush1.msra.mxu0 0.0
        %592 = vmatprep.subr.mxu0 0.0
        %593 = vmatpush1.msra.mxu0 0.0
        %594 = vmatprep.subr.mxu0 0.0
        %595 = vmatpush1.msra.mxu0 0.0
        %596 = vmatprep.subr.mxu0 0.0
        %597 = vmatpush1.msra.mxu0 0.0
        %598 = vmatprep.subr.mxu0 0.0
        %599 = vmatpush1.msra.mxu0 0.0
        %600 = vmatprep.subr.mxu0 0.0
        %601 = vmatpush1.msra.mxu0 0.0
        %602 = vmatprep.subr.mxu0 0.0
        %603 = vmatpush1.msra.mxu0 0.0
        %604 = vmatprep.subr.mxu0 0.0
        %605 = vmatpush1.msra.mxu0 0.0
        %606 = vmatprep.subr.mxu0 0.0
        %607 = vmatpush1.msra.mxu0 0.0
        %608 = vmatprep.subr.mxu0 0.0
        %609 = vmatpush1.msra.mxu0 0.0
        %610 = vmatprep.subr.mxu0 0.0
        %611 = vmatpush1.msra.mxu0 0.0
        %612 = vmatprep.subr.mxu0 0.0
        %613 = vmatpush1.msra.mxu0 0.0
        %614 = vmatprep.subr.mxu0 0.0
        %615 = vmatpush1.msra.mxu0 0.0
        %616 = vmatprep.subr.mxu0 0.0
        %617 = vmatpush1.msra.mxu0 0.0
        %618 = vmatprep.subr.mxu0 0.0
        %619 = vmatpush1.msra.mxu0 0.0
        %620 = vmatprep.subr.mxu0 0.0
        %621 = vmatpush1.msra.mxu0 0.0
        %622 = vmatprep.subr.mxu0 0.0
        %623 = vmatpush1.msra.mxu0 0.0
        %624 = vmatprep.subr.mxu0 0.0
        %625 = vmatpush1.msra.mxu0 0.0
        %626 = vmatprep.subr.mxu0 0.0
        %627 = vmatpush1.msra.mxu0 0.0
        %628 = vmatprep.subr.mxu0 0.0
        %629 = vmatpush1.msra.mxu0 0.0
        %630 = vmatprep.subr.mxu0 0.0
        %631 = vmatpush1.msra.mxu0 0.0
        %632 = vmatprep.subr.mxu0 0.0
        %633 = vmatpush1.msra.mxu0 0.0
        %634 = vmatprep.subr.mxu0 0.0
        %635 = vmatpush1.msra.mxu0 0.0
        %636 = vmatprep.subr.mxu0 0.0
        %637 = vmatpush1.msra.mxu0 0.0
        %638 = vmatprep.subr.mxu0 0.0
        %639 = vmatpush1.msra.mxu0 0.0
        %640 = vmatprep.subr.mxu0 0.0
        %641 = vmatpush1.msra.mxu0 0.0
        %642 = vmatprep.mubr.f32.mxu0 0.0
        %643 = vmatmul.mubr.f32.gmra.mrb[0].mxu0 %v576
        %v644 = vpop.f32.mrb[0].mxu0
        %v645 = vadd.f32 %v572, %v644
        %v646 = vpop.f32.mrb[0].mxu0
        %647 = vdwg.mxu0
        %v648 = vmax.f32 %v645, 0.0
        %v649 = vld [vmem:[%s6] sm:$0xff]
        %v650 = vld [vmem:[%s374] sm:$0xf]
        %v651 = vld [vmem:[%s7] sm:$0xff]
        %653 = vset.pattern.permute.xlu0 0
        %654 = vperm.xlu0 %653, %v651
        %v655 = vpop.permute.xlu0 %654
        %v658 = vsel %vm423, %v649, 0
        %v661 = vsel %vm444, %v650, 0
        %663 = vmatprep.subr.mxu0 0.0
        %664 = vmatpush1.msra.mxu0 %v661
        %665 = vmatprep.subr.mxu0 0.0
        %666 = vmatpush1.msra.mxu0 0.0
        %667 = vmatprep.subr.mxu0 0.0
        %668 = vmatpush1.msra.mxu0 0.0
        %669 = vmatprep.subr.mxu0 0.0
        %670 = vmatpush1.msra.mxu0 0.0
        %671 = vmatprep.subr.mxu0 0.0
        %672 = vmatpush1.msra.mxu0 0.0
        %673 = vmatprep.subr.mxu0 0.0
        %674 = vmatpush1.msra.mxu0 0.0
        %675 = vmatprep.subr.mxu0 0.0
        %676 = vmatpush1.msra.mxu0 0.0
        %677 = vmatprep.subr.mxu0 0.0
        %678 = vmatpush1.msra.mxu0 0.0
        %679 = vmatprep.subr.mxu0 0.0
        %680 = vmatpush1.msra.mxu0 0.0
        %681 = vmatprep.subr.mxu0 0.0
        %682 = vmatpush1.msra.mxu0 0.0
        %683 = vmatprep.subr.mxu0 0.0
        %684 = vmatpush1.msra.mxu0 0.0
        %685 = vmatprep.subr.mxu0 0.0
        %686 = vmatpush1.msra.mxu0 0.0
        %687 = vmatprep.subr.mxu0 0.0
        %688 = vmatpush1.msra.mxu0 0.0
        %689 = vmatprep.subr.mxu0 0.0
        %690 = vmatpush1.msra.mxu0 0.0
        %691 = vmatprep.subr.mxu0 0.0
        %692 = vmatpush1.msra.mxu0 0.0
        %693 = vmatprep.subr.mxu0 0.0
        %694 = vmatpush1.msra.mxu0 0.0
        %695 = vmatprep.subr.mxu0 0.0
        %696 = vmatpush1.msra.mxu0 0.0
        %697 = vmatprep.subr.mxu0 0.0
        %698 = vmatpush1.msra.mxu0 0.0
        %699 = vmatprep.subr.mxu0 0.0
        %700 = vmatpush1.msra.mxu0 0.0
        %701 = vmatprep.subr.mxu0 0.0
        %702 = vmatpush1.msra.mxu0 0.0
        %703 = vmatprep.subr.mxu0 0.0
        %704 = vmatpush1.msra.mxu0 0.0
        %705 = vmatprep.subr.mxu0 0.0
        %706 = vmatpush1.msra.mxu0 0.0
        %707 = vmatprep.subr.mxu0 0.0
        %708 = vmatpush1.msra.mxu0 0.0
        %709 = vmatprep.subr.mxu0 0.0
        %710 = vmatpush1.msra.mxu0 0.0
        %711 = vmatprep.subr.mxu0 0.0
        %712 = vmatpush1.msra.mxu0 0.0
        %713 = vmatprep.subr.mxu0 0.0
        %714 = vmatpush1.msra.mxu0 0.0
        %715 = vmatprep.subr.mxu0 0.0
        %716 = vmatpush1.msra.mxu0 0.0
        %717 = vmatprep.subr.mxu0 0.0
        %718 = vmatpush1.msra.mxu0 0.0
        %719 = vmatprep.subr.mxu0 0.0
        %720 = vmatpush1.msra.mxu0 0.0
        %721 = vmatprep.subr.mxu0 0.0
        %722 = vmatpush1.msra.mxu0 0.0
        %723 = vmatprep.subr.mxu0 0.0
        %724 = vmatpush1.msra.mxu0 0.0
        %725 = vmatprep.subr.mxu0 0.0
        %726 = vmatpush1.msra.mxu0 0.0
        %727 = vmatprep.mubr.f32.mxu0 0.0
        %728 = vmatmul.mubr.f32.gmra.mrb[0].mxu0 %v658
        %v729 = vpop.f32.mrb[0].mxu0
        %v730 = vadd.f32 %v655, %v729
        %v731 = vpop.f32.mrb[0].mxu0
        %732 = vdwg.mxu0
        %v733 = vadd.f32 %v648, %v730
        %v734 = vmax.f32 %v733, 0.0
        %735 = vst [vmem:[%s354] sm:$0xff] %v734
        %s736 = sand.u32 %s232, 1
        %s737 = scalar_lea.sflag [#allocation7], %s736
        %s738 = sand.u32 %s232, 1
        %s739 = smul.addr %s738, 8
        %s740 = scalar_lea.vmem [#allocation6], %s739
        // Predicated region
        $region61: #{tpu_custom_call.1} parent=51 // pred_check
          %p741 = pneg %p242
        $region62: #{tpu_custom_call.1} parent=51 // pred_check_branch
          %743 = sbr.rel (%p741) target = $region64
        $region63: #{tpu_custom_call.1} parent=51 // pred_region
          %s745 = ssub.s32 128, 128
          %746 = vsyncadd %s737, %s745
          %s747 = sadd.s32 %s27, %s26
          %s748 = smul.addr %s747, 128
          %s749 = scalar_lea.hbm %s8, %s748
          %s751 = sshll.u32 %s740, 4
          %s752 = int_to_ptr.vmem [resolvable:$true] %s751
          %754 = dma.vmem_to_hbm [thread:$0]  %s752, 128, %s749, %s737
        $region64: #{tpu_custom_call.1} parent=51 // pred_fallthru
          _
      $region52: #{tpu_custom_call.1} parent=5 // pred_fallthru
        _
      %p755 = scmp.le.s32.totalorder 2, %s17
      // Predicated region
      $region65: #{tpu_custom_call.1} parent=5 // pred_check
        %p756 = pneg %p755
      $region66: #{tpu_custom_call.1} parent=5 // pred_check_branch
        %758 = sbr.rel (%p756) target = $region68
      $region67: #{tpu_custom_call.1} parent=5 // pred_region
        %s759 = ssub.s32 %s17, 2
        // Predicated region
        $region69: #{tpu_custom_call.1} parent=67 // pred_check
          %p760 = pneg %p248
        $region70: #{tpu_custom_call.1} parent=67 // pred_check_branch
          %762 = sbr.rel (%p760) target = $region72
        $region71: #{tpu_custom_call.1} parent=67 // pred_region
          %s763 = sand.u32 %s233, 1
          %s764 = scalar_lea.sflag [#allocation7], %s763
          %s765 = sand.u32 %s233, 1
          %s766 = smul.addr %s765, 8
          %s767 = scalar_lea.vmem [#allocation6], %s766
          %768 = dma.done %s764, 128
        $region72: #{tpu_custom_call.1} parent=67 // pred_fallthru
          _
      $region68: #{tpu_custom_call.1} parent=5 // pred_fallthru
        _
    $region6: #{tpu_custom_call.1} parent=1 // loop_footer
      %s21 = sadd.s32 1, %s17
    $region7: #{tpu_custom_call.1} parent=1 // loop_footer_branch
      %16 = sbr.rel target = $region3
    $region8: #{tpu_custom_call.1} parent=1 // loop_exit
      _
    %769 = vsyncpa [#allocation7], 1
    %s770 = scalar_lea.sflag [#allocation7], 1
    %771 = vsyncpa %s770, 1

</llo_original>
